<compile_context>
chip_gen: v6e
topology: v6e:2x2x1
jax: 0.10.0
libtpu: 0.0.40
codegen_flags: <defaults>
</compile_context>

<pallas_src>
import jax
import jax.numpy as jnp
from jax.experimental import pallas as pl
from jax.experimental.pallas import tpu as pltpu

LANE = 128  # TPU lane width; the batch tile must be a multiple of this.


def mlp_kernel(xT_ref, w1T_ref, b1_ref, w2T_ref, b2_ref, w3T_ref, b3_ref, oT_ref):
    # Layer 1: h1^T = tanh(W1^T @ x^T + b1).  bf16 MXU inputs, f32 accumulate;
    # bias-add + tanh in f32 (v5e-safe).
    h = jnp.tanh(
        jnp.dot(w1T_ref[...], xT_ref[...], preferred_element_type=jnp.float32)
        + b1_ref[...]
    )
    # Layer 2: h2^T = tanh(W2^T @ h1^T + b2).
    h = jnp.tanh(
        jnp.dot(w2T_ref[...], h.astype(jnp.bfloat16),
                preferred_element_type=jnp.float32)
        + b2_ref[...]
    )
    # Layer 3 (linear, nonlin=False): lane-dense (nout, TB) slab, unmasked stores.
    oT_ref[...] = (
        jnp.dot(w3T_ref[...], h.astype(jnp.bfloat16),
                preferred_element_type=jnp.float32)
        + b3_ref[...]
    )


def prepare_params(params):
    """One-time layout/dtype prep (hoisted out of the forward per review).

    W_i (nin, nout) f32 -> W_i^T (nout, nin) bf16 (MXU input format);
    b_i (1, nout)  f32 -> (nout, 1) f32 (broadcast across the lane/batch axis).
    """
    prepared = []
    for w, b in params:
        prepared.append((jnp.asarray(w.T, jnp.bfloat16),
                         jnp.asarray(b.reshape(-1, 1), jnp.float32)))
    return prepared


def mlp_forward(x, prepared, *, tb=None):
    """x: (B, nin) float32, one sample per row.  Returns (B, nout) float32."""
    (w1T, b1), (w2T, b2), (w3T, b3) = prepared
    B, nin = x.shape
    h1, h2, nout = w1T.shape[0], w2T.shape[0], w3T.shape[0]

    # Batch on the lane axis: lane-dense x^T; in a fused pipeline the producer
    # could emit this layout (and bf16) directly.
    xT = jnp.asarray(x.T, jnp.bfloat16)                      # (nin, B)

    if tb is None:
        # Prefer exactly 2 grid steps (one per v7x TensorCore) with the largest
        # possible tile; fall back to 128-wide tiles otherwise.
        tb = B // 2 if B % (2 * LANE) == 0 else LANE
    assert B % tb == 0 and tb % LANE == 0, "batch must tile into 128-lane chunks"

    def resident(a):
        # Full array, constant block index: DMA'd once, VMEM-resident across steps.
        return pl.BlockSpec(a.shape, lambda i: (0,) * a.ndim)

    flops = 2 * B * (nin * h1 + h1 * h2 + h2 * nout)
    transcendentals = B * (h1 + h2)
    bytes_accessed = (
        2 * B * nin                                   # x^T (bf16)
        + 2 * (nin * h1 + h1 * h2 + h2 * nout)        # W^T  (bf16)
        + 4 * (h1 + h2 + nout)                        # biases (f32)
        + 4 * nout * B                                # output slab (f32)
    )

    outT = pl.pallas_call(
        mlp_kernel,
        out_shape=jax.ShapeDtypeStruct((nout, B), jnp.float32),
        grid=(B // tb,),
        in_specs=[
            pl.BlockSpec((nin, tb), lambda i: (0, i)),   # x^T tiled along lanes
            resident(w1T), resident(b1),
            resident(w2T), resident(b2),
            resident(w3T), resident(b3),
        ],
        out_specs=pl.BlockSpec((nout, tb), lambda i: (0, i)),
        compiler_params=pltpu.CompilerParams(
            dimension_semantics=("parallel",),       # v7x: one tile per TensorCore
            vmem_limit_bytes=32 * 1024 * 1024,       # well under every gen's budget
        ),
        cost_estimate=pl.CostEstimate(
            flops=flops,
            transcendentals=transcendentals,
            bytes_accessed=bytes_accessed,
        ),
    )(xT, w1T, b1, w2T, b2, w3T, b3)

    # Kernel's native output is the (nout, B) slab; layout-aware consumers can
    # take outT directly and skip this tiny final transpose.
    return outT.T


def init_params(key, nin, nouts):
    # Mirrors Neuron.__init__: w ~ Uniform(-1, 1) * nin**-0.5, b = 0.
    # TODO(synk): the original script's custom RNG(50) stream is not reproducible
    # here; we use jax.random with the same distribution instead.
    sizes = [nin] + list(nouts)
    params = []
    for i in range(len(nouts)):
        key, wk = jax.random.split(key)
        w = jax.random.uniform(
            wk, (sizes[i], sizes[i + 1]), jnp.float32, minval=-1.0, maxval=1.0
        ) * (sizes[i] ** -0.5)
        b = jnp.zeros((1, sizes[i + 1]), jnp.float32)
        params.append((w, b))
    return params


def mlp_reference(x, params):
    # Pure-JAX f32 reference of the PyTorch forward.
    n_layers = len(params)
    h = x
    for i, (w, b) in enumerate(params):
        h = h @ w + b
        if i != n_layers - 1:   # nonlin=True for all but the last layer
            h = jnp.tanh(h)
    return h


def mlp_reference_bf16(x, params):
    # Same math as the kernel: bf16 MXU inputs, f32 accumulation/bias/tanh.
    n_layers = len(params)
    h = x.astype(jnp.bfloat16)
    for i, (w, b) in enumerate(params):
        h = jnp.dot(h, w.astype(jnp.bfloat16),
                    preferred_element_type=jnp.float32) + b
        if i != n_layers - 1:
            h = jnp.tanh(h).astype(jnp.bfloat16)
    return h


if __name__ == "__main__":
    key = jax.random.PRNGKey(0)
    nin, nouts = 16, [32, 32, 8]   # MLP(16, [32, 32, 8])
    B = 256                        # batched samples; 2 parallel grid steps of 128

    pkey, xkey = jax.random.split(key)
    params = init_params(pkey, nin, nouts)
    prepared = prepare_params(params)
    x = jax.random.uniform(xkey, (B, nin), jnp.float32, minval=-1.0, maxval=1.0)

    out = jax.block_until_ready(mlp_forward(x, prepared))

    assert out.shape == (B, nouts[-1]) and out.dtype == jnp.float32

    # Tight check against the same-precision (bf16 MXU inputs, f32 accumulate) math.
    ref_bf16 = mlp_reference_bf16(x, params)
    assert jnp.allclose(out, ref_bf16, atol=5e-4, rtol=5e-4)

    # Sanity check against the full-f32 PyTorch-equivalent forward
    # (difference bounded by bf16 input quantization).
    ref_f32 = mlp_reference(x, params)
    assert jnp.allclose(out, ref_f32, atol=5e-2, rtol=5e-2)

    print("KERNEL_OK")
</pallas_src>

<mosaic_0001>
module attributes {stable_mosaic.version = 11 : i64} {
  func.func @mlp_kernel(%arg0: i32, %arg1: memref<16x128xbf16, #tpu.memory_space<vmem>>, %arg2: memref<32x16xbf16, #tpu.memory_space<vmem>>, %arg3: memref<32x1xf32, #tpu.memory_space<vmem>>, %arg4: memref<32x32xbf16, #tpu.memory_space<vmem>>, %arg5: memref<32x1xf32, #tpu.memory_space<vmem>>, %arg6: memref<8x32xbf16, #tpu.memory_space<vmem>>, %arg7: memref<8x1xf32, #tpu.memory_space<vmem>>, %arg8: memref<8x128xf32, #tpu.memory_space<vmem>>) attributes {dimension_semantics = [#tpu.dimension_semantics<parallel>], iteration_bounds = array<i64: 2>, scalar_prefetch = 0 : i64, scratch_operands = 0 : i64, tpu.core_type = #tpu.core_type<tc>, window_params = [{transform_indices = @transform_0, window_bounds = array<i64: 16, 128>}, {pipeline_mode = #tpu.pipeline_mode<synchronous>, transform_indices = @transform_1, window_bounds = array<i64: 32, 16>}, {pipeline_mode = #tpu.pipeline_mode<synchronous>, transform_indices = @transform_2, window_bounds = array<i64: 32, 1>}, {pipeline_mode = #tpu.pipeline_mode<synchronous>, transform_indices = @transform_3, window_bounds = array<i64: 32, 32>}, {pipeline_mode = #tpu.pipeline_mode<synchronous>, transform_indices = @transform_4, window_bounds = array<i64: 32, 1>}, {pipeline_mode = #tpu.pipeline_mode<synchronous>, transform_indices = @transform_5, window_bounds = array<i64: 8, 32>}, {pipeline_mode = #tpu.pipeline_mode<synchronous>, transform_indices = @transform_6, window_bounds = array<i64: 8, 1>}, {transform_indices = @transform_7, window_bounds = array<i64: 8, 128>}]} {
    %c0 = arith.constant 0 : index
    %c0_0 = arith.constant 0 : index
    %0 = vector.load %arg2[%c0, %c0_0] : memref<32x16xbf16, #tpu.memory_space<vmem>>, vector<32x16xbf16>
    %c0_1 = arith.constant 0 : index
    %c0_2 = arith.constant 0 : index
    %1 = vector.load %arg1[%c0_1, %c0_2] : memref<16x128xbf16, #tpu.memory_space<vmem>>, vector<16x128xbf16>
    %cst = arith.constant dense<0.000000e+00> : vector<32x128xf32>
    %2 = tpu.matmul %0, %1, %cst {dimension_numbers = #tpu.dot_dimension_numbers<[1], [0], [0], [1], [0, 0, 1, 1], [], []>} : vector<32x16xbf16>, vector<16x128xbf16>, vector<32x128xf32> -> vector<32x128xf32>
    %c0_3 = arith.constant 0 : index
    %c0_4 = arith.constant 0 : index
    %3 = vector.load %arg3[%c0_3, %c0_4] : memref<32x1xf32, #tpu.memory_space<vmem>>, vector<32x1xf32>
    %4 = vector.broadcast %3 : vector<32x1xf32> to vector<32x128xf32>
    %5 = arith.addf %2, %4 : vector<32x128xf32>
    %6 = math.tanh %5 : vector<32x128xf32>
    %c0_5 = arith.constant 0 : index
    %c0_6 = arith.constant 0 : index
    %7 = vector.load %arg4[%c0_5, %c0_6] : memref<32x32xbf16, #tpu.memory_space<vmem>>, vector<32x32xbf16>
    %8 = arith.truncf %6 : vector<32x128xf32> to vector<32x128xbf16>
    %cst_7 = arith.constant dense<0.000000e+00> : vector<32x128xf32>
    %9 = tpu.matmul %7, %8, %cst_7 {dimension_numbers = #tpu.dot_dimension_numbers<[1], [0], [0], [1], [0, 0, 1, 1], [], []>} : vector<32x32xbf16>, vector<32x128xbf16>, vector<32x128xf32> -> vector<32x128xf32>
    %c0_8 = arith.constant 0 : index
    %c0_9 = arith.constant 0 : index
    %10 = vector.load %arg5[%c0_8, %c0_9] : memref<32x1xf32, #tpu.memory_space<vmem>>, vector<32x1xf32>
    %11 = vector.broadcast %10 : vector<32x1xf32> to vector<32x128xf32>
    %12 = arith.addf %9, %11 : vector<32x128xf32>
    %13 = math.tanh %12 : vector<32x128xf32>
    %c0_10 = arith.constant 0 : index
    %c0_11 = arith.constant 0 : index
    %14 = vector.load %arg6[%c0_10, %c0_11] : memref<8x32xbf16, #tpu.memory_space<vmem>>, vector<8x32xbf16>
    %15 = arith.truncf %13 : vector<32x128xf32> to vector<32x128xbf16>
    %cst_12 = arith.constant dense<0.000000e+00> : vector<8x128xf32>
    %16 = tpu.matmul %14, %15, %cst_12 {dimension_numbers = #tpu.dot_dimension_numbers<[1], [0], [0], [1], [0, 0, 1, 1], [], []>} : vector<8x32xbf16>, vector<32x128xbf16>, vector<8x128xf32> -> vector<8x128xf32>
    %c0_13 = arith.constant 0 : index
    %c0_14 = arith.constant 0 : index
    %17 = vector.load %arg7[%c0_13, %c0_14] : memref<8x1xf32, #tpu.memory_space<vmem>>, vector<8x1xf32>
    %18 = vector.broadcast %17 : vector<8x1xf32> to vector<8x128xf32>
    %19 = arith.addf %16, %18 : vector<8x128xf32>
    %c0_15 = arith.constant 0 : index
    %c0_16 = arith.constant 0 : index
    %20 = vector.load %arg8[%c0_15, %c0_16] : memref<8x128xf32, #tpu.memory_space<vmem>>, vector<8x128xf32>
    tpu.vector_store %arg8[%c0_15, %c0_16], %19 {strides = array<i32>} : memref<8x128xf32, #tpu.memory_space<vmem>>, vector<8x128xf32>,
    return
  }
  func.func @transform_0(%arg0: i32) -> (i32, i32) {
    %c0_i32 = arith.constant 0 : i32
    %c0_i32_0 = arith.constant 0 : i32
    return %c0_i32, %arg0 : i32, i32
  }
  func.func @transform_1(%arg0: i32) -> (i32, i32) {
    %c0_i32 = arith.constant 0 : i32
    %c0_i32_0 = arith.constant 0 : i32
    %c0_i32_1 = arith.constant 0 : i32
    return %c0_i32, %c0_i32_0 : i32, i32
  }
  func.func @transform_2(%arg0: i32) -> (i32, i32) {
    %c0_i32 = arith.constant 0 : i32
    %c0_i32_0 = arith.constant 0 : i32
    %c0_i32_1 = arith.constant 0 : i32
    return %c0_i32, %c0_i32_0 : i32, i32
  }
  func.func @transform_3(%arg0: i32) -> (i32, i32) {
    %c0_i32 = arith.constant 0 : i32
    %c0_i32_0 = arith.constant 0 : i32
    %c0_i32_1 = arith.constant 0 : i32
    return %c0_i32, %c0_i32_0 : i32, i32
  }
  func.func @transform_4(%arg0: i32) -> (i32, i32) {
    %c0_i32 = arith.constant 0 : i32
    %c0_i32_0 = arith.constant 0 : i32
    %c0_i32_1 = arith.constant 0 : i32
    return %c0_i32, %c0_i32_0 : i32, i32
  }
  func.func @transform_5(%arg0: i32) -> (i32, i32) {
    %c0_i32 = arith.constant 0 : i32
    %c0_i32_0 = arith.constant 0 : i32
    %c0_i32_1 = arith.constant 0 : i32
    return %c0_i32, %c0_i32_0 : i32, i32
  }
  func.func @transform_6(%arg0: i32) -> (i32, i32) {
    %c0_i32 = arith.constant 0 : i32
    %c0_i32_0 = arith.constant 0 : i32
    %c0_i32_1 = arith.constant 0 : i32
    return %c0_i32, %c0_i32_0 : i32, i32
  }
  func.func @transform_7(%arg0: i32) -> (i32, i32) {
    %c0_i32 = arith.constant 0 : i32
    %c0_i32_0 = arith.constant 0 : i32
    return %c0_i32, %arg0 : i32, i32
  }
}

</mosaic_0001>

<llo_original>
// kernel: tpu_custom_call.1
$region0: #{tpu_custom_call.1}
  #allocation0 [shape = 'u32[]', space=smem, size = 0x4, offset = 0x4, fixed_abs, tag = 'smem constant byte address 0x4 - core index']
  #allocation1 [shape = 'u32[144,128]{1,0:T(1,128)}', space=vmem, size = 0x12000, scoped, tag = 'internal scratch']
  %s0 = inlined_call_operand.vmem [shape: bf16[16,256], index: 0, kind: input, shape index: {}]
  %s1 = inlined_call_operand.vmem [shape: bf16[32,16], index: 1, kind: input, shape index: {}]
  %s2 = inlined_call_operand.vmem [shape: f32[32,1], index: 2, kind: input, shape index: {}]
  %s3 = inlined_call_operand.vmem [shape: bf16[32,32], index: 3, kind: input, shape index: {}]
  %s4 = inlined_call_operand.vmem [shape: f32[32,1], index: 4, kind: input, shape index: {}]
  %s5 = inlined_call_operand.vmem [shape: bf16[8,32], index: 5, kind: input, shape index: {}]
  %s6 = inlined_call_operand.vmem [shape: f32[8,1], index: 6, kind: input, shape index: {}]
  %s7 = inlined_call_operand.hbm [shape: f32[8,256], index: 7, kind: output, shape index: {}]
  %s8 = sld [smem:[#allocation0]]
  $region102: #{tpu_custom_call.1} parent=0
    _
  %s10 = ssub.s32 1, %s8
  %s11 = scalar_select 0, %s10, %s8
  $region1: #{tpu_custom_call.1} parent=0
    #allocation2 [shape = 'u8[8192]{0}', space=vmem, size = 0x2000, scoped, tag = 'input window, operand 0']
    #allocation3 [shape = 'u8[8192]{0}', space=vmem, size = 0x2000, scoped, tag = 'output window, operand 0']
    #allocation4 [shape = 's32[2]{0}', space=sflag, size = 0x8, scoped, tag = 'scoped memory for tpu_custom_call.1']
    %12 = vsyncpa [#allocation4], 0
    %s13 = scalar_lea.sflag [#allocation4], 1
    %14 = vsyncpa %s13, 0
    loop: start=0, step=1, limit=4
    $region2: #{tpu_custom_call.1} parent=1 // loop_pre_header
      _
    $region3: #{tpu_custom_call.1} parent=1 // loop_header
      %s16 = sphi 0, %s20
      %p17 = scmp.ge.s32.totalorder %s16, 4
      %s26 = sphi 0, %s28
      %s29 = sphi 0, %s26
      %s30 = sphi 0, %s29
      %s46 = sphi 0, %s30
      %s50 = sphi 0, %s50
      %s52 = sphi 0, %s50
      %s53 = sphi 0, %s52
      %s67 = sphi 0, %s53
      %s71 = sphi 0, %s71
      %s73 = sphi 0, %s71
      %s74 = sphi 0, %s73
      %s88 = sphi 0, %s74
      %s92 = sphi 0, %s92
      %s94 = sphi 0, %s92
      %s95 = sphi 0, %s94
      %s109 = sphi 0, %s95
      %s113 = sphi 0, %s113
      %s115 = sphi 0, %s113
      %s116 = sphi 0, %s115
      %s130 = sphi 0, %s116
      %s134 = sphi 0, %s134
      %s136 = sphi 0, %s134
      %s137 = sphi 0, %s136
      %s151 = sphi 0, %s137
      %s155 = sphi 0, %s155
      %s157 = sphi 0, %s155
      %s158 = sphi 0, %s157
      %s172 = sphi 0, %s158
      %s178 = sphi 0, %s180
      %s181 = sphi 0, %s178
      %s182 = sphi 0, %s181
      %s198 = sphi 0, %s182
    $region4: #{tpu_custom_call.1} parent=1 // loop_header_branch
      %19 = sbr.rel (%p17) target = $region8
    $region5: #{tpu_custom_call.1} parent=1 // loop_body
      %s21 = ssub.s32 %s16, 1
      %s22 = ssub.s32 %s16, 2
      %s23 = sadd.s32 %s16, 1
      %s24 = ssub.s32 %s16, %s23
      %p25 = scmp.eq.s32.totalorder %s24, 0
      %s27 = sadd.s32 %s26, 1
      %s28 = scalar_select %p25, %s26, %s27
      %p31 = pneg %p25
      %p32 = scmp.eq.s32.totalorder %s16, 1
      %p33 = por %p31, %p32
      %p34 = scmp.ne.s32.totalorder %s26, %s29
      %p35 = scmp.eq.s32.totalorder %s16, 0
      %p36 = por %p34, %p35
      %p37 = scmp.ne.s32.totalorder %s26, %s29
      %p38 = scmp.eq.s32.totalorder %s21, 1
      %p39 = por %p37, %p38
      %p40 = scmp.ne.s32.totalorder %s29, %s30
      %p41 = scmp.eq.s32.totalorder %s21, 0
      %p42 = por %p40, %p41
      %p43 = scmp.ne.s32.totalorder %s29, %s30
      %p44 = scmp.eq.s32.totalorder %s22, 1
      %p45 = por %p43, %p44
      %p47 = scmp.ne.s32.totalorder %s30, %s46
      %p48 = scmp.eq.s32.totalorder %s22, 0
      %p49 = por %p47, %p48
      %s51 = sadd.s32 %s50, 1
      %p54 = scmp.eq.s32.totalorder %s16, 1
      %p55 = scmp.ne.s32.totalorder %s50, %s52
      %p56 = scmp.eq.s32.totalorder %s16, 0
      %p57 = por %p55, %p56
      %p58 = scmp.ne.s32.totalorder %s50, %s52
      %p59 = scmp.eq.s32.totalorder %s21, 1
      %p60 = por %p58, %p59
      %p61 = scmp.ne.s32.totalorder %s52, %s53
      %p62 = scmp.eq.s32.totalorder %s21, 0
      %p63 = por %p61, %p62
      %p64 = scmp.ne.s32.totalorder %s52, %s53
      %p65 = scmp.eq.s32.totalorder %s22, 1
      %p66 = por %p64, %p65
      %p68 = scmp.ne.s32.totalorder %s53, %s67
      %p69 = scmp.eq.s32.totalorder %s22, 0
      %p70 = por %p68, %p69
      %s72 = sadd.s32 %s71, 1
      %p75 = scmp.eq.s32.totalorder %s16, 1
      %p76 = scmp.ne.s32.totalorder %s71, %s73
      %p77 = scmp.eq.s32.totalorder %s16, 0
      %p78 = por %p76, %p77
      %p79 = scmp.ne.s32.totalorder %s71, %s73
      %p80 = scmp.eq.s32.totalorder %s21, 1
      %p81 = por %p79, %p80
      %p82 = scmp.ne.s32.totalorder %s73, %s74
      %p83 = scmp.eq.s32.totalorder %s21, 0
      %p84 = por %p82, %p83
      %p85 = scmp.ne.s32.totalorder %s73, %s74
      %p86 = scmp.eq.s32.totalorder %s22, 1
      %p87 = por %p85, %p86
      %p89 = scmp.ne.s32.totalorder %s74, %s88
      %p90 = scmp.eq.s32.totalorder %s22, 0
      %p91 = por %p89, %p90
      %s93 = sadd.s32 %s92, 1
      %p96 = scmp.eq.s32.totalorder %s16, 1
      %p97 = scmp.ne.s32.totalorder %s92, %s94
      %p98 = scmp.eq.s32.totalorder %s16, 0
      %p99 = por %p97, %p98
      %p100 = scmp.ne.s32.totalorder %s92, %s94
      %p101 = scmp.eq.s32.totalorder %s21, 1
      %p102 = por %p100, %p101
      %p103 = scmp.ne.s32.totalorder %s94, %s95
      %p104 = scmp.eq.s32.totalorder %s21, 0
      %p105 = por %p103, %p104
      %p106 = scmp.ne.s32.totalorder %s94, %s95
      %p107 = scmp.eq.s32.totalorder %s22, 1
      %p108 = por %p106, %p107
      %p110 = scmp.ne.s32.totalorder %s95, %s109
      %p111 = scmp.eq.s32.totalorder %s22, 0
      %p112 = por %p110, %p111
      %s114 = sadd.s32 %s113, 1
      %p117 = scmp.eq.s32.totalorder %s16, 1
      %p118 = scmp.ne.s32.totalorder %s113, %s115
      %p119 = scmp.eq.s32.totalorder %s16, 0
      %p120 = por %p118, %p119
      %p121 = scmp.ne.s32.totalorder %s113, %s115
      %p122 = scmp.eq.s32.totalorder %s21, 1
      %p123 = por %p121, %p122
      %p124 = scmp.ne.s32.totalorder %s115, %s116
      %p125 = scmp.eq.s32.totalorder %s21, 0
      %p126 = por %p124, %p125
      %p127 = scmp.ne.s32.totalorder %s115, %s116
      %p128 = scmp.eq.s32.totalorder %s22, 1
      %p129 = por %p127, %p128
      %p131 = scmp.ne.s32.totalorder %s116, %s130
      %p132 = scmp.eq.s32.totalorder %s22, 0
      %p133 = por %p131, %p132
      %s135 = sadd.s32 %s134, 1
      %p138 = scmp.eq.s32.totalorder %s16, 1
      %p139 = scmp.ne.s32.totalorder %s134, %s136
      %p140 = scmp.eq.s32.totalorder %s16, 0
      %p141 = por %p139, %p140
      %p142 = scmp.ne.s32.totalorder %s134, %s136
      %p143 = scmp.eq.s32.totalorder %s21, 1
      %p144 = por %p142, %p143
      %p145 = scmp.ne.s32.totalorder %s136, %s137
      %p146 = scmp.eq.s32.totalorder %s21, 0
      %p147 = por %p145, %p146
      %p148 = scmp.ne.s32.totalorder %s136, %s137
      %p149 = scmp.eq.s32.totalorder %s22, 1
      %p150 = por %p148, %p149
      %p152 = scmp.ne.s32.totalorder %s137, %s151
      %p153 = scmp.eq.s32.totalorder %s22, 0
      %p154 = por %p152, %p153
      %s156 = sadd.s32 %s155, 1
      %p159 = scmp.eq.s32.totalorder %s16, 1
      %p160 = scmp.ne.s32.totalorder %s155, %s157
      %p161 = scmp.eq.s32.totalorder %s16, 0
      %p162 = por %p160, %p161
      %p163 = scmp.ne.s32.totalorder %s155, %s157
      %p164 = scmp.eq.s32.totalorder %s21, 1
      %p165 = por %p163, %p164
      %p166 = scmp.ne.s32.totalorder %s157, %s158
      %p167 = scmp.eq.s32.totalorder %s21, 0
      %p168 = por %p166, %p167
      %p169 = scmp.ne.s32.totalorder %s157, %s158
      %p170 = scmp.eq.s32.totalorder %s22, 1
      %p171 = por %p169, %p170
      %p173 = scmp.ne.s32.totalorder %s158, %s172
      %p174 = scmp.eq.s32.totalorder %s22, 0
      %p175 = por %p173, %p174
      %s176 = ssub.s32 %s16, %s23
      %p177 = scmp.eq.s32.totalorder %s176, 0
      %s179 = sadd.s32 %s178, 1
      %s180 = scalar_select %p177, %s178, %s179
      %p183 = pneg %p177
      %p184 = scmp.eq.s32.totalorder %s16, 1
      %p185 = por %p183, %p184
      %p186 = scmp.ne.s32.totalorder %s178, %s181
      %p187 = scmp.eq.s32.totalorder %s16, 0
      %p188 = por %p186, %p187
      %p189 = scmp.ne.s32.totalorder %s178, %s181
      %p190 = scmp.eq.s32.totalorder %s21, 1
      %p191 = por %p189, %p190
      %p192 = scmp.ne.s32.totalorder %s181, %s182
      %p193 = scmp.eq.s32.totalorder %s21, 0
      %p194 = por %p192, %p193
      %p195 = scmp.ne.s32.totalorder %s181, %s182
      %p196 = scmp.eq.s32.totalorder %s22, 1
      %p197 = por %p195, %p196
      %p199 = scmp.ne.s32.totalorder %s182, %s198
      %p200 = scmp.eq.s32.totalorder %s22, 0
      %p201 = por %p199, %p200
      %p202 = scmp.le.s32.totalorder 1, %s16
      %p203 = scmp.lt.s32.totalorder %s16, 3
      %p204 = pnand %p202, %p203
      %p205 = pneg %p204
      // Predicated region
      $region9: #{tpu_custom_call.1} parent=5 // pred_check
        _
      $region10: #{tpu_custom_call.1} parent=5 // pred_check_branch
        %207 = sbr.rel (%p204) target = $region12
      $region11: #{tpu_custom_call.1} parent=5 // pred_region
        %s208 = ssub.s32 %s16, 1
        // Predicated region
        $region13: #{tpu_custom_call.1} parent=11 // pred_check
          %p209 = pneg %p63
        $region14: #{tpu_custom_call.1} parent=11 // pred_check_branch
          %211 = sbr.rel (%p209) target = $region16
        $region15: #{tpu_custom_call.1} parent=11 // pred_region
          _
        $region16: #{tpu_custom_call.1} parent=11 // pred_fallthru
          _
        // Predicated region
        $region17: #{tpu_custom_call.1} parent=11 // pred_check
          %p212 = pneg %p84
        $region18: #{tpu_custom_call.1} parent=11 // pred_check_branch
          %214 = sbr.rel (%p212) target = $region20
        $region19: #{tpu_custom_call.1} parent=11 // pred_region
          _
        $region20: #{tpu_custom_call.1} parent=11 // pred_fallthru
          _
        // Predicated region
        $region21: #{tpu_custom_call.1} parent=11 // pred_check
          %p215 = pneg %p105
        $region22: #{tpu_custom_call.1} parent=11 // pred_check_branch
          %217 = sbr.rel (%p215) target = $region24
        $region23: #{tpu_custom_call.1} parent=11 // pred_region
          _
        $region24: #{tpu_custom_call.1} parent=11 // pred_fallthru
          _
        // Predicated region
        $region25: #{tpu_custom_call.1} parent=11 // pred_check
          %p218 = pneg %p126
        $region26: #{tpu_custom_call.1} parent=11 // pred_check_branch
          %220 = sbr.rel (%p218) target = $region28
        $region27: #{tpu_custom_call.1} parent=11 // pred_region
          _
        $region28: #{tpu_custom_call.1} parent=11 // pred_fallthru
          _
        // Predicated region
        $region29: #{tpu_custom_call.1} parent=11 // pred_check
          %p221 = pneg %p147
        $region30: #{tpu_custom_call.1} parent=11 // pred_check_branch
          %223 = sbr.rel (%p221) target = $region32
        $region31: #{tpu_custom_call.1} parent=11 // pred_region
          _
        $region32: #{tpu_custom_call.1} parent=11 // pred_fallthru
          _
        // Predicated region
        $region33: #{tpu_custom_call.1} parent=11 // pred_check
          %p224 = pneg %p168
        $region34: #{tpu_custom_call.1} parent=11 // pred_check_branch
          %226 = sbr.rel (%p224) target = $region36
        $region35: #{tpu_custom_call.1} parent=11 // pred_region
          _
        $region36: #{tpu_custom_call.1} parent=11 // pred_fallthru
          _
      $region12: #{tpu_custom_call.1} parent=5 // pred_fallthru
        _
      %p227 = scmp.lt.s32.totalorder %s16, 2
      // Predicated region
      $region37: #{tpu_custom_call.1} parent=5 // pred_check
        %p228 = pneg %p227
      $region38: #{tpu_custom_call.1} parent=5 // pred_check_branch
        %230 = sbr.rel (%p228) target = $region40
      $region39: #{tpu_custom_call.1} parent=5 // pred_region
        // Predicated region
        $region41: #{tpu_custom_call.1} parent=39 // pred_check
          %p231 = pneg %p36
        $region42: #{tpu_custom_call.1} parent=39 // pred_check_branch
          %233 = sbr.rel (%p231) target = $region44
        $region43: #{tpu_custom_call.1} parent=39 // pred_region
          %s234 = sand.u32 %s26, 1
          %s235 = sand.u32 %s26, 1
          %s236 = smul.addr %s235, 8
          %s237 = scalar_lea.vmem [#allocation2], %s236
          %s238 = smul.addr %s16, 4
          %s239 = scalar_lea.vmem %s0, %s238
          // Predicated region
          $region45: #{tpu_custom_call.1} parent=43 // pred_check
            _
          $region46: #{tpu_custom_call.1} parent=43 // pred_check_branch
            %241 = sbr.rel (0) target = $region48
          $region47: #{tpu_custom_call.1} parent=43 // pred_region
            // Predicated region
            $region49: #{tpu_custom_call.1} parent=47 // pred_check
              _
            $region50: #{tpu_custom_call.1} parent=47 // pred_check_branch
              %243 = sbr.rel target = $region52
            $region51: #{tpu_custom_call.1} parent=47 // pred_region
              // Predicated region
              $region64: #{tpu_custom_call.1} parent=51 // pred_check
                _
              $region65: #{tpu_custom_call.1} parent=51 // pred_check_branch
                %261 = sbr.rel (0) target = $region67
              $region66: #{tpu_custom_call.1} parent=51 // pred_region
                loop: start=0, step=1, limit=1
                $region68: #{tpu_custom_call.1} parent=66 // loop_pre_header
                  _
                $region69: #{tpu_custom_call.1} parent=66 // loop_header
                  %s263 = sphi 0, %s267
                  %p264 = scmp.ge.s32.totalorder %s263, 1
                  %s268 = sphi %s239, %s239
                  %s269 = sphi %s237, %s237
                $region70: #{tpu_custom_call.1} parent=66 // loop_header_branch
                  %266 = sbr.rel (%p264) target = $region74
                $region71: #{tpu_custom_call.1} parent=66 // loop_body
                  _
                $region72: #{tpu_custom_call.1} parent=66 // loop_footer
                  %s267 = sadd.s32 1, %s263
                $region73: #{tpu_custom_call.1} parent=66 // loop_footer_branch
                  %262 = sbr.rel target = $region69
                $region74: #{tpu_custom_call.1} parent=66 // loop_exit
                  _
                %s271 = ssub.s32 16, 1
                loop: start=0, step=1, limit=1
                $region75: #{tpu_custom_call.1} parent=66 // loop_pre_header
                  _
                $region76: #{tpu_custom_call.1} parent=66 // loop_header
                  %s273 = sphi 0, %s277
                  %p274 = scmp.ge.s32.totalorder %s273, 1
                  %s278 = sphi %s239, %s239
                  %s279 = sphi %s237, %s237
                $region77: #{tpu_custom_call.1} parent=66 // loop_header_branch
                  %276 = sbr.rel (%p274) target = $region81
                $region78: #{tpu_custom_call.1} parent=66 // loop_body
                  %v280 = vld [vmem:[%s278] sm:%s271]
                  %281 = vst [vmem:[%s279] sm:%s271] %v280
                  %v282 = vld [vmem:[%s278 + $0x8] sm:%s271]
                  %283 = vst [vmem:[%s279 + $0x4] sm:%s271] %v282
                $region79: #{tpu_custom_call.1} parent=66 // loop_footer
                  %s277 = sadd.s32 1, %s273
                $region80: #{tpu_custom_call.1} parent=66 // loop_footer_branch
                  %272 = sbr.rel target = $region76
                $region81: #{tpu_custom_call.1} parent=66 // loop_exit
                  _
              $region67: #{tpu_custom_call.1} parent=51 // pred_fallthru
                _
            $region52: #{tpu_custom_call.1} parent=47 // pred_fallthru
              _
            // Predicated region
            $region53: #{tpu_custom_call.1} parent=47 // pred_check
              _
            $region54: #{tpu_custom_call.1} parent=47 // pred_check_branch
              %245 = sbr.rel (0) target = $region56
            $region55: #{tpu_custom_call.1} parent=47 // pred_region
              %s247 = ssub.s32 16, 1
              loop: start=0, step=1, limit=1
              $region57: #{tpu_custom_call.1} parent=55 // loop_pre_header
                _
              $region58: #{tpu_custom_call.1} parent=55 // loop_header
                %s249 = sphi 0, %s253
                %p250 = scmp.ge.s32.totalorder %s249, 1
                %s254 = sphi %s239, %s239
                %s255 = sphi %s237, %s237
              $region59: #{tpu_custom_call.1} parent=55 // loop_header_branch
                %252 = sbr.rel (%p250) target = $region63
              $region60: #{tpu_custom_call.1} parent=55 // loop_body
                %v256 = vld [vmem:[%s254] sm:%s247]
                %257 = vst [vmem:[%s255] sm:%s247] %v256
                %v258 = vld [vmem:[%s254 + $0x8] sm:%s247]
                %259 = vst [vmem:[%s255 + $0x4] sm:%s247] %v258
              $region61: #{tpu_custom_call.1} parent=55 // loop_footer
                %s253 = sadd.s32 1, %s249
              $region62: #{tpu_custom_call.1} parent=55 // loop_footer_branch
                %248 = sbr.rel target = $region58
              $region63: #{tpu_custom_call.1} parent=55 // loop_exit
                _
            $region56: #{tpu_custom_call.1} parent=47 // pred_fallthru
              _
          $region48: #{tpu_custom_call.1} parent=43 // pred_fallthru
            _
          %284 = vnop
        $region44: #{tpu_custom_call.1} parent=39 // pred_fallthru
          _
      $region40: #{tpu_custom_call.1} parent=5 // pred_fallthru
        _
      %p285 = scmp.le.s32.totalorder 1, %s16
      %p286 = scmp.lt.s32.totalorder %s16, 3
      %p287 = pnand %p285, %p286
      %p288 = pneg %p287
      // Predicated region
      $region82: #{tpu_custom_call.1} parent=5 // pred_check
        _
      $region83: #{tpu_custom_call.1} parent=5 // pred_check_branch
        %290 = sbr.rel (%p287) target = $region85
      $region84: #{tpu_custom_call.1} parent=5 // pred_region
        %s291 = ssub.s32 %s16, 1
        %s292 = sand.u32 %s29, 1
        %s293 = sand.u32 %s29, 1
        %s294 = smul.addr %s293, 8
        %s295 = scalar_lea.vmem [#allocation2], %s294
        // Predicated region
        $region86: #{tpu_custom_call.1} parent=84 // pred_check
          %p296 = pneg %p42
        $region87: #{tpu_custom_call.1} parent=84 // pred_check_branch
          %298 = sbr.rel (%p296) target = $region89
        $region88: #{tpu_custom_call.1} parent=84 // pred_region
          _
        $region89: #{tpu_custom_call.1} parent=84 // pred_fallthru
          _
        %s299 = sand.u32 %s29, 1
        %s300 = sand.u32 %s29, 1
        %s301 = smul.addr %s300, 8
        %s302 = scalar_lea.vmem [#allocation2], %s301
        %p303 = pneg %p42
        %p304 = pneg %p39
        %p305 = pneg %p63
        %p306 = pneg %p60
        %p307 = pneg %p84
        %p308 = pneg %p81
        %p309 = pneg %p105
        %p310 = pneg %p102
        %p311 = pneg %p126
        %p312 = pneg %p123
        %p313 = pneg %p147
        %p314 = pneg %p144
        %p315 = pneg %p168
        %p316 = pneg %p165
        %p317 = pneg %p194
        %p318 = pneg %p191
        %s319 = sand.u32 %s181, 1
        %s320 = scalar_lea.sflag [#allocation4], %s319
        %s321 = sand.u32 %s181, 1
        %s322 = smul.addr %s321, 8
        %s323 = scalar_lea.vmem [#allocation3], %s322
        %v325 = vld [vmem:[%s1] sm:$0xf]
        %v326 = vld [vmem:[%s1 + $0x4] sm:$0xf]
        %v327 = vld [vmem:[%s1 + $0x8] sm:$0xf]
        %v328 = vld [vmem:[%s1 + $0xc] sm:$0xf]
        %v329 = vld [vmem:[%s295] sm:$0xf]
        %v330 = vld [vmem:[%s295 + $0x4] sm:$0xf]
        %v331 = vld [vmem:[%s2] sm:$0xff]
        %v332 = vld [vmem:[%s2 + $0x8] sm:$0xff]
        %v333 = vld [vmem:[%s2 + $0x10] sm:$0xff]
        %v334 = vld [vmem:[%s2 + $0x18] sm:$0xff]
        %336 = vset.pattern.permute.xlu0 0
        %337 = vperm.xlu0 %336, %v331
        %v338 = vpop.permute.xlu0 %337
        %341 = vset.pattern.permute.xlu0 0
        %342 = vperm.xlu0 %341, %v332
        %v343 = vpop.permute.xlu0 %342
        %346 = vset.pattern.permute.xlu0 0
        %347 = vperm.xlu0 %346, %v333
        %v348 = vpop.permute.xlu0 %347
        %351 = vset.pattern.permute.xlu0 0
        %352 = vperm.xlu0 %351, %v334
        %v353 = vpop.permute.xlu0 %352
        %v359 = vunpack.c.l.b16 %v325
        %v360 = vunpack.c.l.b16 %v326
        %v361 = vunpack.c.l.b16 %v327
        %v362 = vunpack.c.l.b16 %v328
        %v363 = vpack.c.b16 %v360, %v359
        %v364 = vpack.c.b16 %v362, %v361
        %v367 = vunpack.c.l.b16 %v329
        %v368 = vunpack.c.l.b16 %v330
        %v369 = vpack.c.b16 %v368, %v367
        %vm371 = vcmask 130048
        %v373 = vsel %vm371, %v363, 0
        %v376 = vsel %vm371, %v364, 0
        %378 = vmatprep.subr.bf16.mxu0 0
        %379 = vmatpush1.bf16.msra.mxu0 0
        %380 = vmatprep.subr.bf16.mxu0 0
        %381 = vmatpush1.bf16.msra.mxu0 0
        %382 = vmatprep.subr.bf16.mxu0 0
        %383 = vmatpush1.bf16.msra.mxu0 0
        %384 = vmatprep.subr.bf16.mxu0 0
        %385 = vmatpush1.bf16.msra.mxu0 0
        %386 = vmatprep.subr.bf16.mxu0 0
        %387 = vmatpush1.bf16.msra.mxu0 0
        %388 = vmatprep.subr.bf16.mxu0 0
        %389 = vmatpush1.bf16.msra.mxu0 0
        %390 = vmatprep.subr.bf16.mxu0 0
        %391 = vmatpush1.bf16.msra.mxu0 0
        %392 = vmatprep.subr.bf16.mxu0 0
        %393 = vmatpush1.bf16.msra.mxu0 %v369
        %394 = vmatprep.subr.bf16.mxu0 0
        %395 = vmatpush2.bf16.msra.mxu0 0
        %396 = vmatprep.subr.bf16.mxu0 0
        %397 = vmatpush2.bf16.msra.mxu0 0
        %398 = vmatprep.subr.bf16.mxu0 0
        %399 = vmatpush2.bf16.msra.mxu0 0
        %400 = vmatprep.subr.bf16.mxu0 0
        %401 = vmatpush2.bf16.msra.mxu0 0
        %402 = vmatprep.subr.bf16.mxu0 0
        %403 = vmatpush2.bf16.msra.mxu0 0
        %404 = vmatprep.subr.bf16.mxu0 0
        %405 = vmatpush2.bf16.msra.mxu0 0
        %406 = vmatprep.subr.bf16.mxu0 0
        %407 = vmatpush2.bf16.msra.mxu0 0
        %408 = vmatprep.subr.bf16.mxu0 0
        %409 = vmatpush2.bf16.msra.mxu0 0
        %410 = vmatprep.mubr.bf16.mxu0 0
        %411 = vmatmul.mubr.bf16.gmra.mxu0 %v373
        %v412 = vpop.f32.mrf.mxu0
        %v413 = vadd.f32 %v338, %v412
        %v414 = vpop.f32.mrf.mxu0
        %v415 = vpop.f32.mrf.mxu0
        %v416 = vadd.f32 %v343, %v415
        %v417 = vpop.f32.mrf.mxu0
        %418 = vmatprep.mubr.bf16.mxu0 0
        %419 = vmatmul.mubr.bf16.gmra.mxu0 %v376
        %v420 = vpop.f32.mrf.mxu0
        %v421 = vadd.f32 %v348, %v420
        %v422 = vpop.f32.mrf.mxu0
        %v423 = vpop.f32.mrf.mxu0
        %v424 = vadd.f32 %v353, %v423
        %v425 = vpop.f32.mrf.mxu0
        %426 = vdwg.mxu0
        %v427 = vtanh.pop %v413
        %v428 = vtanh.pop %v416
        %v429 = vtanh.pop %v421
        %v430 = vtanh.pop %v424
        %v431 = vld [vmem:[%s3] sm:$0xf]
        %v432 = vld [vmem:[%s3 + $0x4] sm:$0xf]
        %v433 = vld [vmem:[%s3 + $0x8] sm:$0xf]
        %v434 = vld [vmem:[%s3 + $0xc] sm:$0xf]
        %v435 = vpack.c.bf16 %v428, %v427
        %v436 = vpack.c.bf16 %v430, %v429
        %v437 = vld [vmem:[%s4] sm:$0xff]
        %v438 = vld [vmem:[%s4 + $0x8] sm:$0xff]
        %v439 = vld [vmem:[%s4 + $0x10] sm:$0xff]
        %v440 = vld [vmem:[%s4 + $0x18] sm:$0xff]
        %442 = vset.pattern.permute.xlu0 0
        %443 = vperm.xlu0 %442, %v437
        %v444 = vpop.permute.xlu0 %443
        %447 = vset.pattern.permute.xlu0 0
        %448 = vperm.xlu0 %447, %v438
        %v449 = vpop.permute.xlu0 %448
        %452 = vset.pattern.permute.xlu0 0
        %453 = vperm.xlu0 %452, %v439
        %v454 = vpop.permute.xlu0 %453
        %457 = vset.pattern.permute.xlu0 0
        %458 = vperm.xlu0 %457, %v440
        %v459 = vpop.permute.xlu0 %458
        %v465 = vunpack.c.l.b16 %v431
        %v466 = vunpack.c.l.b16 %v432
        %v467 = vunpack.c.l.b16 %v433
        %v468 = vunpack.c.l.b16 %v434
        %v469 = vpack.c.b16 %v466, %v465
        %v470 = vpack.c.b16 %v468, %v467
        %vm471 = vcmask 261120
        %v473 = vsel %vm471, %v469, 0
        %v476 = vsel %vm471, %v470, 0
        %478 = vmatprep.subr.bf16.mxu0 0
        %479 = vmatpush1.bf16.msra.mxu0 0
        %480 = vmatprep.subr.bf16.mxu0 0
        %481 = vmatpush1.bf16.msra.mxu0 0
        %482 = vmatprep.subr.bf16.mxu0 0
        %483 = vmatpush1.bf16.msra.mxu0 0
        %484 = vmatprep.subr.bf16.mxu0 0
        %485 = vmatpush1.bf16.msra.mxu0 0
        %486 = vmatprep.subr.bf16.mxu0 0
        %487 = vmatpush1.bf16.msra.mxu0 0
        %488 = vmatprep.subr.bf16.mxu0 0
        %489 = vmatpush1.bf16.msra.mxu0 0
        %490 = vmatprep.subr.bf16.mxu0 0
        %491 = vmatpush1.bf16.msra.mxu0 %v436
        %492 = vmatprep.subr.bf16.mxu0 0
        %493 = vmatpush1.bf16.msra.mxu0 %v435
        %494 = vmatprep.subr.bf16.mxu0 0
        %495 = vmatpush2.bf16.msra.mxu0 0
        %496 = vmatprep.subr.bf16.mxu0 0
        %497 = vmatpush2.bf16.msra.mxu0 0
        %498 = vmatprep.subr.bf16.mxu0 0
        %499 = vmatpush2.bf16.msra.mxu0 0
        %500 = vmatprep.subr.bf16.mxu0 0
        %501 = vmatpush2.bf16.msra.mxu0 0
        %502 = vmatprep.subr.bf16.mxu0 0
        %503 = vmatpush2.bf16.msra.mxu0 0
        %504 = vmatprep.subr.bf16.mxu0 0
        %505 = vmatpush2.bf16.msra.mxu0 0
        %506 = vmatprep.subr.bf16.mxu0 0
        %507 = vmatpush2.bf16.msra.mxu0 0
        %508 = vmatprep.subr.bf16.mxu0 0
        %509 = vmatpush2.bf16.msra.mxu0 0
        %510 = vmatprep.mubr.bf16.mxu0 0
        %511 = vmatmul.mubr.bf16.gmra.mxu0 %v473
        %v512 = vpop.f32.mrf.mxu0
        %v513 = vadd.f32 %v444, %v512
        %v514 = vpop.f32.mrf.mxu0
        %v515 = vpop.f32.mrf.mxu0
        %v516 = vadd.f32 %v449, %v515
        %v517 = vpop.f32.mrf.mxu0
        %518 = vmatprep.mubr.bf16.mxu0 0
        %519 = vmatmul.mubr.bf16.gmra.mxu0 %v476
        %v520 = vpop.f32.mrf.mxu0
        %v521 = vadd.f32 %v454, %v520
        %v522 = vpop.f32.mrf.mxu0
        %v523 = vpop.f32.mrf.mxu0
        %v524 = vadd.f32 %v459, %v523
        %v525 = vpop.f32.mrf.mxu0
        %526 = vdwg.mxu0
        %v527 = vtanh.pop %v513
        %v528 = vtanh.pop %v516
        %v529 = vtanh.pop %v521
        %v530 = vtanh.pop %v524
        %v531 = vld [vmem:[%s5] sm:$0xf]
        %v532 = vpack.c.bf16 %v528, %v527
        %v533 = vpack.c.bf16 %v530, %v529
        %v534 = vld [vmem:[%s6] sm:$0xff]
        %536 = vset.pattern.permute.xlu0 0
        %537 = vperm.xlu0 %536, %v534
        %v538 = vpop.permute.xlu0 %537
        %v541 = vsel %vm471, %v531, 0
        %543 = vmatprep.subr.bf16.mxu0 0
        %544 = vmatpush1.bf16.msra.mxu0 0
        %545 = vmatprep.subr.bf16.mxu0 0
        %546 = vmatpush1.bf16.msra.mxu0 0
        %547 = vmatprep.subr.bf16.mxu0 0
        %548 = vmatpush1.bf16.msra.mxu0 0
        %549 = vmatprep.subr.bf16.mxu0 0
        %550 = vmatpush1.bf16.msra.mxu0 0
        %551 = vmatprep.subr.bf16.mxu0 0
        %552 = vmatpush1.bf16.msra.mxu0 0
        %553 = vmatprep.subr.bf16.mxu0 0
        %554 = vmatpush1.bf16.msra.mxu0 0
        %555 = vmatprep.subr.bf16.mxu0 0
        %556 = vmatpush1.bf16.msra.mxu0 %v533
        %557 = vmatprep.subr.bf16.mxu0 0
        %558 = vmatpush1.bf16.msra.mxu0 %v532
        %559 = vmatprep.subr.bf16.mxu0 0
        %560 = vmatpush2.bf16.msra.mxu0 0
        %561 = vmatprep.subr.bf16.mxu0 0
        %562 = vmatpush2.bf16.msra.mxu0 0
        %563 = vmatprep.subr.bf16.mxu0 0
        %564 = vmatpush2.bf16.msra.mxu0 0
        %565 = vmatprep.subr.bf16.mxu0 0
        %566 = vmatpush2.bf16.msra.mxu0 0
        %567 = vmatprep.subr.bf16.mxu0 0
        %568 = vmatpush2.bf16.msra.mxu0 0
        %569 = vmatprep.subr.bf16.mxu0 0
        %570 = vmatpush2.bf16.msra.mxu0 0
        %571 = vmatprep.subr.bf16.mxu0 0
        %572 = vmatpush2.bf16.msra.mxu0 0
        %573 = vmatprep.subr.bf16.mxu0 0
        %574 = vmatpush2.bf16.msra.mxu0 0
        %575 = vmatprep.mubr.bf16.mxu0 0
        %576 = vmatmul.mubr.bf16.gmra.mxu0 %v541
        %v577 = vpop.f32.mrf.mxu0
        %v578 = vadd.f32 %v538, %v577
        %v579 = vpop.f32.mrf.mxu0
        %v580 = vpop.f32.mrf.mxu0
        %v581 = vpop.f32.mrf.mxu0
        %582 = vdwg.mxu0
        %583 = vst [vmem:[%s323] sm:$0xff] %v578
        %s584 = sand.u32 %s181, 1
        %s585 = scalar_lea.sflag [#allocation4], %s584
        %s586 = sand.u32 %s181, 1
        %s587 = smul.addr %s586, 8
        %s588 = scalar_lea.vmem [#allocation3], %s587
        // Predicated region
        $region90: #{tpu_custom_call.1} parent=84 // pred_check
          %p589 = pneg %p191
        $region91: #{tpu_custom_call.1} parent=84 // pred_check_branch
          %591 = sbr.rel (%p589) target = $region93
        $region92: #{tpu_custom_call.1} parent=84 // pred_region
          %s593 = ssub.s32 128, 128
          %594 = vsyncadd %s585, %s593
          %s595 = smul.addr %s21, 128
          %s596 = scalar_lea.hbm %s7, %s595
          %s598 = sshll.u32 %s588, 4
          %s599 = int_to_ptr.vmem [resolvable:$true] %s598
          %601 = dma.vmem_to_hbm [thread:$0]  %s599, 128, %s596, %s585
        $region93: #{tpu_custom_call.1} parent=84 // pred_fallthru
          _
      $region85: #{tpu_custom_call.1} parent=5 // pred_fallthru
        _
      %p602 = scmp.le.s32.totalorder 2, %s16
      // Predicated region
      $region94: #{tpu_custom_call.1} parent=5 // pred_check
        %p603 = pneg %p602
      $region95: #{tpu_custom_call.1} parent=5 // pred_check_branch
        %605 = sbr.rel (%p603) target = $region97
      $region96: #{tpu_custom_call.1} parent=5 // pred_region
        %s606 = ssub.s32 %s16, 2
        // Predicated region
        $region98: #{tpu_custom_call.1} parent=96 // pred_check
          %p607 = pneg %p197
        $region99: #{tpu_custom_call.1} parent=96 // pred_check_branch
          %609 = sbr.rel (%p607) target = $region101
        $region100: #{tpu_custom_call.1} parent=96 // pred_region
          %s610 = sand.u32 %s182, 1
          %s611 = scalar_lea.sflag [#allocation4], %s610
          %s612 = sand.u32 %s182, 1
          %s613 = smul.addr %s612, 8
          %s614 = scalar_lea.vmem [#allocation3], %s613
          %615 = dma.done %s611, 128
        $region101: #{tpu_custom_call.1} parent=96 // pred_fallthru
          _
      $region97: #{tpu_custom_call.1} parent=5 // pred_fallthru
        _
    $region6: #{tpu_custom_call.1} parent=1 // loop_footer
      %s20 = sadd.s32 1, %s16
    $region7: #{tpu_custom_call.1} parent=1 // loop_footer_branch
      %15 = sbr.rel target = $region3
    $region8: #{tpu_custom_call.1} parent=1 // loop_exit
      _
    %616 = vsyncpa [#allocation4], 1
    %s617 = scalar_lea.sflag [#allocation4], 1
    %618 = vsyncpa %s617, 1

</llo_original>
